<compile_context>
chip_gen: v6e
topology: v6e:2x2x1
jax: 0.10.0
libtpu: 0.0.40
codegen_flags: <defaults>
</compile_context>

<pallas_src>
import jax
import jax.numpy as jnp
from jax.experimental import pallas as pl
from jax.experimental.pallas import tpu as pltpu

_EPS = 1e-6  # F.pairwise_distance default eps (added to the difference, as in PyTorch)


def _round_up(x, m):
    return ((x + m - 1) // m) * m


def _make_kernel(*, k, use_seg, B, margin):
    inv_b = 1.0 / float(B)
    margin = float(margin)

    def kernel(*refs):
        if use_seg:
            o1_ref, o2_ref, wpos_ref, wneg_ref, seg_ref, out_ref, acc_ref = refs
        else:
            o1_ref, o2_ref, wpos_ref, wneg_ref, out_ref, acc_ref = refs

        i = pl.program_id(0)

        @pl.when(i == 0)
        def _init():
            acc_ref[...] = jnp.zeros_like(acc_ref)

        # Stream native-dtype tiles; cast to f32 on the VPU.
        o1 = o1_ref[...].astype(jnp.float32)            # (TBP, W)
        o2 = o2_ref[...].astype(jnp.float32)            # (TBP, W)
        diff = (o1 - o2) + _EPS                         # eps added per element, as in PyTorch
        dsq = diff * diff                               # (TBP, W)

        if use_seg:
            # Packed layout: each 128-lane row holds k samples of D features.
            # Segmented lane-sum via a resident block-diagonal ones matrix on
            # the (otherwise idle) MXU.
            d2 = jnp.dot(dsq, seg_ref[...],
                         preferred_element_type=jnp.float32)    # (TBP, k)
        else:
            d2 = jnp.sum(dsq, axis=-1, keepdims=True)           # (TBP, 1)

        d = jnp.sqrt(d2)
        hinge = jnp.maximum(margin - d, 0.0)
        # w_pos = orig_label * valid, w_neg = (1 - orig_label) * valid
        #   ==> padded samples contribute exactly zero; label flip already folded.
        per_sample = wpos_ref[...] * d2 + wneg_ref[...] * (hinge * hinge)

        acc_ref[...] += jnp.sum(per_sample)

        @pl.when(i == pl.num_programs(0) - 1)
        def _finalize():
            # single static multiply by 1/B at the end (no per-step divide)
            out_ref[...] = acc_ref[...] * inv_b

    return kernel


def contrastive_loss(output1, output2, label, *, margin=2.0):
    """output1, output2: (B, D); label: (B,). Returns the scalar mean contrastive loss (f32)."""
    assert output1.shape == output2.shape and output1.ndim == 2
    B, D = output1.shape
    label = jnp.asarray(label).reshape(B).astype(jnp.float32)

    # Lane packing: k = 128 // D samples side by side in one 128-lane row when D divides 128.
    if D < 128 and 128 % D == 0:
        k = 128 // D
    else:
        k = 1
    W = k * D
    use_seg = k > 1

    rows = -(-B // k)                       # packed rows holding real samples
    itemsize = jnp.dtype(output1.dtype).itemsize

    # Tile size: up to 1024 packed rows (HBM-roofline sweet spot); cap the
    # double-buffered working set at ~8 MiB so defaults work on v5e/v6e/v7x.
    vmem_budget = 8 * 1024 * 1024
    lane_w = _round_up(W, 128)              # VMEM lane padding
    per_row_bytes = 2 * 2 * lane_w * itemsize + 2 * 2 * max(k, 1) * 4
    tbp_cap = max(8, (vmem_budget // per_row_bytes) // 8 * 8)
    TBP = min(1024, tbp_cap, _round_up(rows, 8))

    num_tiles = -(-rows // TBP)
    rows_pad = num_tiles * TBP
    B_pad = rows_pad * k

    if B_pad != B:
        pad = B_pad - B
        output1 = jnp.pad(output1, ((0, pad), (0, 0)))
        output2 = jnp.pad(output2, ((0, pad), (0, 0)))
        label = jnp.pad(label, (0, pad))

    o1p = output1.reshape(rows_pad, W)      # native dtype; cast happens in-kernel
    o2p = output2.reshape(rows_pad, W)

    # Fold label flip + padding mask into two tiny weight streams.
    valid = (jnp.arange(B_pad) < B).astype(jnp.float32)
    w_pos = (label * valid).reshape(rows_pad, k)
    w_neg = ((1.0 - label) * valid).reshape(rows_pad, k)

    inputs = [o1p, o2p, w_pos, w_neg]
    in_specs = [
        pl.BlockSpec((TBP, W), lambda i: (i, 0)),
        pl.BlockSpec((TBP, W), lambda i: (i, 0)),
        pl.BlockSpec((TBP, k), lambda i: (i, 0)),
        pl.BlockSpec((TBP, k), lambda i: (i, 0)),
    ]
    if use_seg:
        # Block-diagonal ones (W, k): seg[r, c] = 1 iff r // D == c.  Built once,
        # constant block index -> stays resident in VMEM across the whole grid.
        seg = (jnp.arange(W)[:, None] // D == jnp.arange(k)[None, :]).astype(jnp.float32)
        inputs.append(seg)
        in_specs.append(pl.BlockSpec((W, k), lambda i: (0, 0)))

    kernel = _make_kernel(k=k, use_seg=use_seg, B=B, margin=margin)

    out = pl.pallas_call(
        kernel,
        out_shape=jax.ShapeDtypeStruct((1, 1), jnp.float32),
        grid_spec=pltpu.PrefetchScalarGridSpec(
            num_scalar_prefetch=0,
            grid=(num_tiles,),
            in_specs=in_specs,
            out_specs=pl.BlockSpec((1, 1), lambda i: (0, 0)),
            scratch_shapes=[pltpu.VMEM((1, 1), jnp.float32)],
        ),
        compiler_params=pltpu.CompilerParams(
            # carried scalar accumulator => the batch axis is a serial reduction
            dimension_semantics=("arbitrary",),
        ),
    )(*inputs)
    return out[0, 0]


def _reference(output1, output2, label, margin=2.0):
    # Pure-JAX reference mirroring the PyTorch forward.
    label = 1.0 - label.astype(jnp.float32)
    d = jnp.sqrt(jnp.sum((output1 - output2 + _EPS) ** 2, axis=-1))
    loss = jnp.mean((1.0 - label) * d ** 2 +
                    label * jnp.maximum(margin - d, 0.0) ** 2)
    return loss


if __name__ == "__main__":
    key = jax.random.PRNGKey(0)
    k1, k2, k3 = jax.random.split(key, 3)

    B, D = 8, 32  # small embedding-pair shapes consistent with the module
    output1 = jax.random.normal(k1, (B, D), dtype=jnp.float32)
    output2 = jax.random.normal(k2, (B, D), dtype=jnp.float32)
    label = jax.random.bernoulli(k3, 0.5, (B,)).astype(jnp.float32)

    loss = jax.block_until_ready(contrastive_loss(output1, output2, label))
    ref = _reference(output1, output2, label)
    assert jnp.allclose(loss, ref, rtol=1e-5, atol=1e-5), (loss, ref)

    # Odd batch size exercises the padding-weight masking.
    B2 = 7
    loss2 = jax.block_until_ready(
        contrastive_loss(output1[:B2], output2[:B2], label[:B2]))
    ref2 = _reference(output1[:B2], output2[:B2], label[:B2])
    assert jnp.allclose(loss2, ref2, rtol=1e-5, atol=1e-5), (loss2, ref2)

    # Larger feature dim exercises the k == 1 (no lane-packing) path.
    B3, D3 = 8, 256
    o1b = jax.random.normal(k1, (B3, D3), dtype=jnp.float32)
    o2b = jax.random.normal(k2, (B3, D3), dtype=jnp.float32)
    lab3 = jax.random.bernoulli(k3, 0.5, (B3,)).astype(jnp.float32)
    loss3 = jax.block_until_ready(contrastive_loss(o1b, o2b, lab3))
    ref3 = _reference(o1b, o2b, lab3)
    assert jnp.allclose(loss3, ref3, rtol=1e-5, atol=1e-5), (loss3, ref3)

    print("KERNEL_OK")
</pallas_src>

<mosaic_0001>
module attributes {stable_mosaic.version = 11 : i64} {
  func.func @kernel(%arg0: i32, %arg1: memref<8x128xf32, #tpu.memory_space<vmem>>, %arg2: memref<8x128xf32, #tpu.memory_space<vmem>>, %arg3: memref<8x4xf32, #tpu.memory_space<vmem>>, %arg4: memref<8x4xf32, #tpu.memory_space<vmem>>, %arg5: memref<128x4xf32, #tpu.memory_space<vmem>>, %arg6: memref<1x1xf32, #tpu.memory_space<vmem>>, %arg7: memref<1x1xf32, #tpu.memory_space<vmem>>) attributes {dimension_semantics = [#tpu.dimension_semantics<arbitrary>], iteration_bounds = array<i64: 1>, scalar_prefetch = 0 : i64, scratch_operands = 1 : i64, tpu.core_type = #tpu.core_type<tc>, window_params = [{transform_indices = @transform_0, window_bounds = array<i64: 8, 128>}, {transform_indices = @transform_1, window_bounds = array<i64: 8, 128>}, {transform_indices = @transform_2, window_bounds = array<i64: 8, 4>}, {transform_indices = @transform_3, window_bounds = array<i64: 8, 4>}, {pipeline_mode = #tpu.pipeline_mode<synchronous>, transform_indices = @transform_4, window_bounds = array<i64: 128, 4>}, {pipeline_mode = #tpu.pipeline_mode<synchronous>, transform_indices = @transform_5, window_bounds = array<i64: 1, 1>}]} {
    %c0_i32 = arith.constant 0 : i32
    %0 = arith.cmpi eq, %arg0, %c0_i32 : i32
    %1 = arith.extui %0 : i1 to i32
    %c0_i32_0 = arith.constant 0 : i32
    %2 = arith.cmpi ne, %1, %c0_i32_0 : i32
    scf.if %2 {
      %cst_20 = arith.constant 0.000000e+00 : f32
      %33 = vector.broadcast %cst_20 : f32 to vector<1x1xf32>
      %c0_21 = arith.constant 0 : index
      %c0_22 = arith.constant 0 : index
      %34 = vector.load %arg7[%c0_21, %c0_22] : memref<1x1xf32, #tpu.memory_space<vmem>>, vector<1x1xf32>
      tpu.vector_store %arg7[%c0_21, %c0_22], %33 {strides = array<i32>} : memref<1x1xf32, #tpu.memory_space<vmem>>, vector<1x1xf32>,
    } else {
    }
    %c0 = arith.constant 0 : index
    %c0_1 = arith.constant 0 : index
    %3 = vector.load %arg1[%c0, %c0_1] : memref<8x128xf32, #tpu.memory_space<vmem>>, vector<8x128xf32>
    %c0_2 = arith.constant 0 : index
    %c0_3 = arith.constant 0 : index
    %4 = vector.load %arg2[%c0_2, %c0_3] : memref<8x128xf32, #tpu.memory_space<vmem>>, vector<8x128xf32>
    %5 = arith.subf %3, %4 : vector<8x128xf32>
    %cst = arith.constant 9.99999997E-7 : f32
    %6 = vector.broadcast %cst : f32 to vector<8x128xf32>
    %7 = arith.addf %5, %6 : vector<8x128xf32>
    %8 = arith.mulf %7, %7 : vector<8x128xf32>
    %c0_4 = arith.constant 0 : index
    %c0_5 = arith.constant 0 : index
    %9 = vector.load %arg5[%c0_4, %c0_5] : memref<128x4xf32, #tpu.memory_space<vmem>>, vector<128x4xf32>
    %cst_6 = arith.constant dense<0.000000e+00> : vector<8x4xf32>
    %10 = tpu.matmul %8, %9, %cst_6 {dimension_numbers = #tpu.dot_dimension_numbers<[1], [0], [0], [1], [0, 0, 1, 1], [], []>} : vector<8x128xf32>, vector<128x4xf32>, vector<8x4xf32> -> vector<8x4xf32>
    %11 = math.sqrt %10 : vector<8x4xf32>
    %cst_7 = arith.constant 2.000000e+00 : f32
    %12 = vector.broadcast %cst_7 : f32 to vector<8x4xf32>
    %13 = arith.subf %12, %11 : vector<8x4xf32>
    %cst_8 = arith.constant 0.000000e+00 : f32
    %14 = vector.broadcast %cst_8 : f32 to vector<8x4xf32>
    %15 = arith.maximumf %13, %14 : vector<8x4xf32>
    %c0_9 = arith.constant 0 : index
    %c0_10 = arith.constant 0 : index
    %16 = vector.load %arg3[%c0_9, %c0_10] : memref<8x4xf32, #tpu.memory_space<vmem>>, vector<8x4xf32>
    %17 = arith.mulf %16, %10 : vector<8x4xf32>
    %c0_11 = arith.constant 0 : index
    %c0_12 = arith.constant 0 : index
    %18 = vector.load %arg4[%c0_11, %c0_12] : memref<8x4xf32, #tpu.memory_space<vmem>>, vector<8x4xf32>
    %19 = arith.mulf %15, %15 : vector<8x4xf32>
    %20 = arith.mulf %18, %19 : vector<8x4xf32>
    %21 = arith.addf %17, %20 : vector<8x4xf32>
    %c0_13 = arith.constant 0 : index
    %c0_14 = arith.constant 0 : index
    %22 = vector.load %arg7[%c0_13, %c0_14] : memref<1x1xf32, #tpu.memory_space<vmem>>, vector<1x1xf32>
    %23 = vector.shape_cast %21 : vector<8x4xf32> to vector<1x8x4xf32>
    %cst_15 = arith.constant dense<0.000000e+00> : vector<1xf32>
    %24 = vector.multi_reduction <add>, %23, %cst_15 [1, 2] : vector<1x8x4xf32> to vector<1xf32>
    %25 = vector.shape_cast %24 : vector<1xf32> to vector<1x1x1xf32>
    %26 = vector.extract %25[0, 0, 0] : f32 from vector<1x1x1xf32>
    %27 = vector.broadcast %26 : f32 to vector<1x1xf32>
    %28 = arith.addf %22, %27 : vector<1x1xf32>
    %c0_16 = arith.constant 0 : index
    %c0_17 = arith.constant 0 : index
    %29 = vector.load %arg7[%c0_16, %c0_17] : memref<1x1xf32, #tpu.memory_space<vmem>>, vector<1x1xf32>
    tpu.vector_store %arg7[%c0_16, %c0_17], %28 {strides = array<i32>} : memref<1x1xf32, #tpu.memory_space<vmem>>, vector<1x1xf32>,
    %c0_i32_18 = arith.constant 0 : i32
    %30 = arith.cmpi eq, %arg0, %c0_i32_18 : i32
    %31 = arith.extui %30 : i1 to i32
    %c0_i32_19 = arith.constant 0 : i32
    %32 = arith.cmpi ne, %31, %c0_i32_19 : i32
    scf.if %32 {
      %c0_20 = arith.constant 0 : index
      %c0_21 = arith.constant 0 : index
      %33 = vector.load %arg7[%c0_20, %c0_21] : memref<1x1xf32, #tpu.memory_space<vmem>>, vector<1x1xf32>
      %cst_22 = arith.constant 1.250000e-01 : f32
      %34 = vector.broadcast %cst_22 : f32 to vector<1x1xf32>
      %35 = arith.mulf %33, %34 : vector<1x1xf32>
      %c0_23 = arith.constant 0 : index
      %c0_24 = arith.constant 0 : index
      %36 = vector.load %arg6[%c0_23, %c0_24] : memref<1x1xf32, #tpu.memory_space<vmem>>, vector<1x1xf32>
      tpu.vector_store %arg6[%c0_23, %c0_24], %35 {strides = array<i32>} : memref<1x1xf32, #tpu.memory_space<vmem>>, vector<1x1xf32>,
    } else {
    }
    return
  }
  func.func @transform_0(%arg0: i32) -> (i32, i32) {
    %c0_i32 = arith.constant 0 : i32
    %c0_i32_0 = arith.constant 0 : i32
    return %arg0, %c0_i32 : i32, i32
  }
  func.func @transform_1(%arg0: i32) -> (i32, i32) {
    %c0_i32 = arith.constant 0 : i32
    %c0_i32_0 = arith.constant 0 : i32
    return %arg0, %c0_i32 : i32, i32
  }
  func.func @transform_2(%arg0: i32) -> (i32, i32) {
    %c0_i32 = arith.constant 0 : i32
    %c0_i32_0 = arith.constant 0 : i32
    return %arg0, %c0_i32 : i32, i32
  }
  func.func @transform_3(%arg0: i32) -> (i32, i32) {
    %c0_i32 = arith.constant 0 : i32
    %c0_i32_0 = arith.constant 0 : i32
    return %arg0, %c0_i32 : i32, i32
  }
  func.func @transform_4(%arg0: i32) -> (i32, i32) {
    %c0_i32 = arith.constant 0 : i32
    %c0_i32_0 = arith.constant 0 : i32
    %c0_i32_1 = arith.constant 0 : i32
    return %c0_i32, %c0_i32_0 : i32, i32
  }
  func.func @transform_5(%arg0: i32) -> (i32, i32) {
    %c0_i32 = arith.constant 0 : i32
    %c0_i32_0 = arith.constant 0 : i32
    %c0_i32_1 = arith.constant 0 : i32
    return %c0_i32, %c0_i32_0 : i32, i32
  }
}

</mosaic_0001>

<llo_original>
// kernel: tpu_custom_call.1
$region0: #{tpu_custom_call.1}
  #allocation0 [shape = 'u32[]', space=smem, size = 0x4, offset = 0x4, fixed_abs, tag = 'smem constant byte address 0x4 - core index']
  #allocation1 [shape = 'u32[144,128]{1,0:T(1,128)}', space=vmem, size = 0x12000, scoped, tag = 'internal scratch']
  #allocation2 [shape = 'f32[1,1]{1,0:T(1,128)}', space=vmem, size = 0x200, scoped, tag = 'scratch operand']
  %s0 = inlined_call_operand.vmem [shape: f32[8,128], index: 0, kind: input, shape index: {}]
  %s1 = inlined_call_operand.vmem [shape: f32[8,128], index: 1, kind: input, shape index: {}]
  %s2 = inlined_call_operand.vmem [shape: f32[8,4], index: 2, kind: input, shape index: {}]
  %s3 = inlined_call_operand.vmem [shape: f32[8,4], index: 3, kind: input, shape index: {}]
  %s4 = inlined_call_operand.vmem [shape: f32[128,4], index: 4, kind: input, shape index: {}]
  %s5 = inlined_call_operand.hbm [shape: f32[1,1], index: 5, kind: output, shape index: {}]
  %s6 = sld [smem:[#allocation0]]
  $region38: #{tpu_custom_call.1} parent=0
    _
  %s8 = ssub.s32 1, %s6
  %s9 = scalar_select 0, %s8, %s6
  $region1: #{tpu_custom_call.1} parent=0
    #allocation3 [shape = 'u8[512]{0}', space=vmem, size = 0x400, scoped, tag = 'output window, operand 0, single buffered']
    #allocation4 [shape = 's32[1]{0}', space=sflag, size = 0x4, scoped, tag = 'scoped memory for tpu_custom_call.1']
    %10 = vsyncpa [#allocation4], 0
    // Predicated region
    $region2: #{tpu_custom_call.1} parent=1 // pred_check
      _
    $region3: #{tpu_custom_call.1} parent=1 // pred_check_branch
      %12 = sbr.rel (0) target = $region5
    $region4: #{tpu_custom_call.1} parent=1 // pred_region
      _
    $region5: #{tpu_custom_call.1} parent=1 // pred_fallthru
      _
    // Predicated region
    $region6: #{tpu_custom_call.1} parent=1 // pred_check
      _
    $region7: #{tpu_custom_call.1} parent=1 // pred_check_branch
      %14 = sbr.rel (0) target = $region9
    $region8: #{tpu_custom_call.1} parent=1 // pred_region
      _
    $region9: #{tpu_custom_call.1} parent=1 // pred_fallthru
      _
    // Predicated region
    $region10: #{tpu_custom_call.1} parent=1 // pred_check
      _
    $region11: #{tpu_custom_call.1} parent=1 // pred_check_branch
      %16 = sbr.rel (0) target = $region13
    $region12: #{tpu_custom_call.1} parent=1 // pred_region
      _
    $region13: #{tpu_custom_call.1} parent=1 // pred_fallthru
      _
    // Predicated region
    $region14: #{tpu_custom_call.1} parent=1 // pred_check
      _
    $region15: #{tpu_custom_call.1} parent=1 // pred_check_branch
      %18 = sbr.rel (0) target = $region17
    $region16: #{tpu_custom_call.1} parent=1 // pred_region
      _
    $region17: #{tpu_custom_call.1} parent=1 // pred_fallthru
      _
    // Predicated region
    $region18: #{tpu_custom_call.1} parent=1 // pred_check
      _
    $region19: #{tpu_custom_call.1} parent=1 // pred_check_branch
      %20 = sbr.rel (0) target = $region21
    $region20: #{tpu_custom_call.1} parent=1 // pred_region
      _
    $region21: #{tpu_custom_call.1} parent=1 // pred_fallthru
      _
    %p21 = scmp.eq.s32.totalorder 0, 0
    // Predicated region
    $region22: #{tpu_custom_call.1} parent=1 // pred_check
      %p22 = pneg %p21
    $region23: #{tpu_custom_call.1} parent=1 // pred_check_branch
      %24 = sbr.rel (%p22) target = $region25
    $region24: #{tpu_custom_call.1} parent=1 // pred_region
      %vm25 = vcmask 0
      %26 = vst.msk [vmem:[#allocation2] sm:$0x1] %vm25, 0.0
    $region25: #{tpu_custom_call.1} parent=1 // pred_fallthru
      _
    %v27 = vld [vmem:[%s0] sm:$0xff]
    %v28 = vld [vmem:[%s1] sm:$0xff]
    %v29 = vsub.f32 %v27, %v28
    %v30 = vadd.f32 %v29, 1e-06
    %v31 = vmul.f32 %v30, %v30
    %v32 = vld [vmem:[%s4] sm:$0xff]
    %v33 = vld [vmem:[%s4 + $0x8] sm:$0xff]
    %v34 = vld [vmem:[%s4 + $0x10] sm:$0xff]
    %v35 = vld [vmem:[%s4 + $0x18] sm:$0xff]
    %v36 = vld [vmem:[%s4 + $0x20] sm:$0xff]
    %v37 = vld [vmem:[%s4 + $0x28] sm:$0xff]
    %v38 = vld [vmem:[%s4 + $0x30] sm:$0xff]
    %v39 = vld [vmem:[%s4 + $0x38] sm:$0xff]
    %v40 = vld [vmem:[%s4 + $0x40] sm:$0xff]
    %v41 = vld [vmem:[%s4 + $0x48] sm:$0xff]
    %v42 = vld [vmem:[%s4 + $0x50] sm:$0xff]
    %v43 = vld [vmem:[%s4 + $0x58] sm:$0xff]
    %v44 = vld [vmem:[%s4 + $0x60] sm:$0xff]
    %v45 = vld [vmem:[%s4 + $0x68] sm:$0xff]
    %v46 = vld [vmem:[%s4 + $0x70] sm:$0xff]
    %v47 = vld [vmem:[%s4 + $0x78] sm:$0xff]
    %48 = vmatprep.subr.mxu0 0.0
    %49 = vmatpush1.msra.mxu0 %v47
    %50 = vmatprep.subr.mxu0 0.0
    %51 = vmatpush1.msra.mxu0 %v46
    %52 = vmatprep.subr.mxu0 0.0
    %53 = vmatpush1.msra.mxu0 %v45
    %54 = vmatprep.subr.mxu0 0.0
    %55 = vmatpush1.msra.mxu0 %v44
    %56 = vmatprep.subr.mxu0 0.0
    %57 = vmatpush1.msra.mxu0 %v43
    %58 = vmatprep.subr.mxu0 0.0
    %59 = vmatpush1.msra.mxu0 %v42
    %60 = vmatprep.subr.mxu0 0.0
    %61 = vmatpush1.msra.mxu0 %v41
    %62 = vmatprep.subr.mxu0 0.0
    %63 = vmatpush1.msra.mxu0 %v40
    %64 = vmatprep.subr.mxu0 0.0
    %65 = vmatpush1.msra.mxu0 %v39
    %66 = vmatprep.subr.mxu0 0.0
    %67 = vmatpush1.msra.mxu0 %v38
    %68 = vmatprep.subr.mxu0 0.0
    %69 = vmatpush1.msra.mxu0 %v37
    %70 = vmatprep.subr.mxu0 0.0
    %71 = vmatpush1.msra.mxu0 %v36
    %72 = vmatprep.subr.mxu0 0.0
    %73 = vmatpush1.msra.mxu0 %v35
    %74 = vmatprep.subr.mxu0 0.0
    %75 = vmatpush1.msra.mxu0 %v34
    %76 = vmatprep.subr.mxu0 0.0
    %77 = vmatpush1.msra.mxu0 %v33
    %78 = vmatprep.subr.mxu0 0.0
    %79 = vmatpush1.msra.mxu0 %v32
    %80 = vmatprep.subr.mxu0 0.0
    %81 = vmatpush2.msra.mxu0 0.0
    %82 = vmatprep.subr.mxu0 0.0
    %83 = vmatpush2.msra.mxu0 0.0
    %84 = vmatprep.subr.mxu0 0.0
    %85 = vmatpush2.msra.mxu0 0.0
    %86 = vmatprep.subr.mxu0 0.0
    %87 = vmatpush2.msra.mxu0 0.0
    %88 = vmatprep.subr.mxu0 0.0
    %89 = vmatpush2.msra.mxu0 0.0
    %90 = vmatprep.subr.mxu0 0.0
    %91 = vmatpush2.msra.mxu0 0.0
    %92 = vmatprep.subr.mxu0 0.0
    %93 = vmatpush2.msra.mxu0 0.0
    %94 = vmatprep.subr.mxu0 0.0
    %95 = vmatpush2.msra.mxu0 0.0
    %96 = vmatprep.subr.mxu0 0.0
    %97 = vmatpush2.msra.mxu0 0.0
    %98 = vmatprep.subr.mxu0 0.0
    %99 = vmatpush2.msra.mxu0 0.0
    %100 = vmatprep.subr.mxu0 0.0
    %101 = vmatpush2.msra.mxu0 0.0
    %102 = vmatprep.subr.mxu0 0.0
    %103 = vmatpush2.msra.mxu0 0.0
    %104 = vmatprep.subr.mxu0 0.0
    %105 = vmatpush2.msra.mxu0 0.0
    %106 = vmatprep.subr.mxu0 0.0
    %107 = vmatpush2.msra.mxu0 0.0
    %108 = vmatprep.subr.mxu0 0.0
    %109 = vmatpush2.msra.mxu0 0.0
    %110 = vmatprep.subr.mxu0 0.0
    %111 = vmatpush2.msra.mxu0 0.0
    %112 = vmatprep.mubr.f32.mxu0 0.0
    %113 = vmatmul.mubr.f32.gmra.mxu0 %v31
    %v114 = vpop.f32.mrf.mxu0
    %v115 = vadd.f32 0.0, %v114
    %v116 = vpop.f32.mrf.mxu0
    %117 = vdwg.mxu0
    %v118 = vrsqrt.pop %v115
    %v119 = vmul.f32 %v115, %v118
    %vm120 = vcmp.eq.f32.partialorder %v115, inf
    %v121 = vsel %vm120, %v115, %v119
    %vm122 = vcmp.eq.f32.partialorder %v115, 0.0
    %v123 = vand.u32 %v115, 2147483648
    %v124 = vsel %vm122, %v123, %v121
    %v125 = vsub.f32 2.0, %v124
    %v126 = vmax.f32 %v125, 0.0
    %v127 = vld [vmem:[%s2] sm:$0xff]
    %v128 = vmul.f32 %v127, %v115
    %v129 = vld [vmem:[%s3] sm:$0xff]
    %v130 = vmul.f32 %v126, %v126
    %v131 = vmul.f32 %v129, %v130
    %v132 = vadd.f32 %v128, %v131
    %v133 = vld [vmem:[#allocation2] sm:$0x1]
    %vm134 = vcmask 31744
    %v135 = vsel %vm134, %v132, 0.0
    %136 = vadd.xlane.f32.xlu0 %v135
    %v137 = vpop.xlane.xlu0 %136
    %v138 = vrot.slane %v137, 4
    %v139 = vadd.f32 %v137, %v138
    %v140 = vrot.slane %v139, 2
    %v141 = vadd.f32 %v139, %v140
    %v142 = vrot.slane %v141, 1
    %v143 = vadd.f32 %v141, %v142
    %s144 = vtos %v143
    %v145 = vstv %s144
    %v146 = vadd.f32 %v133, %v145
    %vm147 = vcmask 0
    %148 = vst.msk [vmem:[#allocation2] sm:$0x1] %vm147, %v146
    // Predicated region
    $region26: #{tpu_custom_call.1} parent=1 // pred_check
      %p149 = pneg %p21
    $region27: #{tpu_custom_call.1} parent=1 // pred_check_branch
      %151 = sbr.rel (%p149) target = $region29
    $region28: #{tpu_custom_call.1} parent=1 // pred_region
      %v152 = vld [vmem:[#allocation2] sm:$0x1]
      %v153 = vmul.f32 %v152, 0.125
      %154 = vst.msk [vmem:[#allocation3] sm:$0x1] %vm147, %v153
    $region29: #{tpu_custom_call.1} parent=1 // pred_fallthru
      _
    // Predicated region
    $region30: #{tpu_custom_call.1} parent=1 // pred_check
      _
    $region31: #{tpu_custom_call.1} parent=1 // pred_check_branch
      %156 = sbr.rel (0) target = $region33
    $region32: #{tpu_custom_call.1} parent=1 // pred_region
      %s158 = ssub.s32 16, 16
      %159 = vsyncadd [#allocation4], %s158
      %s161 = sshll.u32 [#allocation3], 4
      %s162 = int_to_ptr.vmem [resolvable:$true] %s161
      %164 = dma.vmem_to_hbm [thread:$0]  %s162, 16, %s5, [#allocation4]
    $region33: #{tpu_custom_call.1} parent=1 // pred_fallthru
      _
    // Predicated region
    $region34: #{tpu_custom_call.1} parent=1 // pred_check
      _
    $region35: #{tpu_custom_call.1} parent=1 // pred_check_branch
      %166 = sbr.rel (0) target = $region37
    $region36: #{tpu_custom_call.1} parent=1 // pred_region
      %167 = dma.done [#allocation4], 16
    $region37: #{tpu_custom_call.1} parent=1 // pred_fallthru
      _
    %168 = vsyncpa [#allocation4], 1

</llo_original>
